<compile_context>
chip_gen: v7x
topology: tpu7x:2x2x1
jax: 0.10.0
libtpu: 0.0.40
codegen_flags: <defaults>
</compile_context>

<pallas_src>
import jax
import jax.numpy as jnp
from jax import lax
from jax.experimental import pallas as pl
from jax.experimental.pallas import tpu as pltpu

_NEG_BIG = -1e30


def _round_up(x, m):
    return ((x + m - 1) // m) * m


def _pad_axis(x, axis, target, value=0.0):
    pad = target - x.shape[axis]
    if pad <= 0:
        return x
    widths = [(0, 0)] * x.ndim
    widths[axis] = (0, pad)
    return jnp.pad(x, widths, constant_values=value)


def _vmem_limit_bytes():
    """Generation-aware VMEM budget (v7x: 64 MiB/TC -> 48 MiB; v5e/v6e: 128 -> 96)."""
    try:
        cap = int(pltpu.get_tpu_info().vmem_capacity_bytes)
    except Exception:
        cap = 64 * 1024 * 1024          # conservative (v7x-sized) fallback
    return min(int(0.75 * cap), 100 * 1024 * 1024)


def _make_supcon_kernel(*, inv_t, block_b, block_m, n_mtiles, M, M_pad,
                        dot_precision, explicit_mask, streamed):
    """Emits per anchor row i (matching the reference numerics):
         se[i] = sum_{j valid, j != i} exp(s_ij - m_i)
         sp[i] = sum_{j positive}      exp(s_ij - m_i)
       with s_ij = <anchor_i, contrast_j> / temperature and m_i the row max over
       ALL valid columns (diagonal included) -- the stored moving-average state
       depends on that offset, so it must not be pre-masked."""

    def _sims(anchor_ref, contrast_ref):
        # inv_t folded into the [block_b, D] anchor operand; contraction on the
        # last dims of both operands (no in-kernel transpose of contrast).
        return lax.dot_general(
            anchor_ref[...] * inv_t, contrast_ref[...],
            dimension_numbers=(((1,), (1,)), ((), ())),
            preferred_element_type=jnp.float32,
            precision=dot_precision)

    def _keep(bi, kj):
        # Narrow index vectors; only the != broadcast touches the full tile.
        row_id = lax.broadcasted_iota(jnp.int32, (block_b, 1), 0) + bi * block_b
        col_id = lax.broadcasted_iota(jnp.int32, (1, block_m), 1) + kj * block_m
        keep = col_id != row_id                      # drop only the self column
        if M_pad > M:                                # pad columns only when streamed
            keep = jnp.logical_and(keep, col_id < M)
        return keep

    def _pos_sum(e, rowkey, colinfo):
        if explicit_mask:
            return jnp.sum(colinfo * e, axis=1, keepdims=True)
        # positives: same key, any view (diagonal already zeroed inside e)
        return jnp.sum(jnp.where(rowkey == colinfo, e, 0.0), axis=1, keepdims=True)

    if not streamed:
        # Resident-contrast path: single pass over the full [block_b, M] tile.
        def kernel(*refs):
            if explicit_mask:
                colinfo_ref, anchor_ref, contrast_ref, se_ref, sp_ref = refs
                rowkey = None
            else:
                rk_ref, colinfo_ref, anchor_ref, contrast_ref, se_ref, sp_ref = refs
                rowkey = rk_ref[...]
            s = _sims(anchor_ref, contrast_ref)                  # [bb, M] f32
            m = jnp.max(s, axis=1, keepdims=True)                # incl. diagonal
            e = jnp.exp(jnp.where(_keep(pl.program_id(0), 0), s, _NEG_BIG) - m)
            se_ref[...] = jnp.sum(e, axis=1, keepdims=True).reshape(1, block_b)
            sp_ref[...] = _pos_sum(e, rowkey, colinfo_ref[...]).reshape(1, block_b)
        return kernel

    # Streamed (flash-over-M) fallback for contrast matrices too big for VMEM.
    def kernel(*refs):
        if explicit_mask:
            (colinfo_ref, anchor_ref, contrast_ref, se_ref, sp_ref,
             m_scr, se_scr, sp_scr) = refs
            rowkey = None
        else:
            (rk_ref, colinfo_ref, anchor_ref, contrast_ref, se_ref, sp_ref,
             m_scr, se_scr, sp_scr) = refs
            rowkey = rk_ref[...]
        kj = pl.program_id(1)

        @pl.when(kj == 0)
        def _init():
            m_scr[...] = jnp.full_like(m_scr, _NEG_BIG)
            se_scr[...] = jnp.zeros_like(se_scr)
            sp_scr[...] = jnp.zeros_like(sp_scr)

        s = _sims(anchor_ref, contrast_ref)                       # [bb, bm] f32
        m_prev = m_scr[...]
        m_new = jnp.maximum(m_prev, jnp.max(s, axis=1, keepdims=True))
        alpha = jnp.exp(m_prev - m_new)
        e = jnp.exp(jnp.where(_keep(pl.program_id(0), kj), s, _NEG_BIG) - m_new)
        se_scr[...] = alpha * se_scr[...] + jnp.sum(e, axis=1, keepdims=True)
        sp_scr[...] = alpha * sp_scr[...] + _pos_sum(e, rowkey, colinfo_ref[...])
        m_scr[...] = m_new

        @pl.when(kj == n_mtiles - 1)
        def _finalize():
            se_ref[...] = se_scr[...].reshape(1, block_b)
            sp_ref[...] = sp_scr[...].reshape(1, block_b)
    return kernel


def supcon_forward(features, index, state, labels=None, mask=None,
                   gamma=0.9, temperature=0.07, base_temperature=0.07,
                   mxu_dtype=jnp.bfloat16, block_b_max=128, block_m_max=1024,
                   contrast_resident=None):
    """SupConLoss.forward.  Returns (loss_scalar, new_state dict).

    mxu_dtype=jnp.bfloat16 (default): bf16 MXU inputs, f32 accumulate/postmath.
    mxu_dtype=None: exact f32 path (Precision.HIGHEST), matches the reference.
    contrast_resident: None = auto (VMEM budget), True/False = force layout.
    """
    if features.ndim < 3:
        raise ValueError("`features` needs to be [bsz, n_views, ...], "
                         "at least 3 dimensions are required")
    if labels is not None and mask is not None:
        raise ValueError("Cannot define both `labels` and `mask`")

    B, V = features.shape[0], features.shape[1]
    feats = features.reshape(B, V, -1).astype(jnp.float32)
    D = feats.shape[-1]
    M = B * V

    anchor = feats[:, 0]                                  # [B, D] (anchor_count=1)
    contrast = jnp.swapaxes(feats, 0, 1).reshape(M, D)    # [M, D] view-major

    explicit_mask = mask is not None
    if explicit_mask:
        # TODO(synk): stream only the [B, B] base mask instead of the V-fold tile.
        base = mask.astype(jnp.float32)                   # [B, B]
        colinfo = jnp.tile(base, (1, V))                  # [B, M]
        rowkey = None
        npos = V * jnp.sum(base, axis=1) - jnp.diagonal(base)          # [B]
    else:
        if labels is None:                                # SimCLR: sample id keys
            keys = jnp.arange(B, dtype=jnp.float32)
            npos = jnp.full((B,), float(V - 1), jnp.float32)
        else:
            labels = jnp.asarray(labels).reshape(-1)
            if labels.shape[0] != B:
                raise ValueError("Num of labels does not match num of features")
            keys = labels.astype(jnp.float32)
            same = (keys[:, None] == keys[None, :]).astype(jnp.float32)
            npos = V * jnp.sum(same, axis=1) - 1.0
        rowkey = keys.reshape(B, 1)                       # [B, 1]
        colinfo = jnp.tile(keys, (V,)).reshape(1, M)      # [1, M] column keys

    # Moving-average state gathered by `index` (mirrors the torch buffer math).
    u, v, f1_w, f2_w = state["u"], state["v"], state["f1_w"], state["f2_w"]
    u_sel = u[index].reshape(B, 1)
    f1_sel = f1_w[index].reshape(B, 1)
    v_sel = v[index].reshape(B)
    f2_sel = f2_w[index].reshape(B)
    gamma_eff = jnp.where(jnp.sum(u_sel) == 0.0, 1.0, gamma)
    u_prev = (1.0 - gamma_eff) * (u_sel - f1_sel)                    # [B, 1]
    v_prev = (1.0 - gamma_eff) * (v_sel - f2_sel)                    # [B]

    # ---- tiling -----------------------------------------------------------
    if B > block_b_max:
        block_b = block_b_max
        B_pad = _round_up(B, block_b)
    else:
        # Single B tile.  TODO(synk): a 2-way B split would use both v7x TCs for
        # small B, but sub-128 lane-dense output blocks violate the (8,128) rule;
        # the parallel split kicks in automatically once B > block_b_max.
        block_b, B_pad = B, B
    n_btiles = B_pad // block_b

    esize = 2 if mxu_dtype is not None else 4
    vmem_limit = _vmem_limit_bytes()
    if contrast_resident is None:
        # contrast (x2 pipeline buffers) + anchor (x2) + mask/keys + ~6 f32
        # [block_b, M] intermediates must fit with headroom.
        resident_bytes = (2 * M * D * esize + 2 * block_b * D * esize
                          + (2 * block_b * M * 4 if explicit_mask else 2 * M * 4)
                          + 6 * block_b * M * 4)
        contrast_resident = resident_bytes <= int(0.6 * vmem_limit)

    if contrast_resident:
        block_m, M_pad, n_mtiles = M, M, 1
        grid = (n_btiles,)
        dim_sems = ("parallel",)
    else:
        block_m = min(_round_up(block_m_max, 128), _round_up(M, 128))
        M_pad = _round_up(M, block_m)
        n_mtiles = M_pad // block_m
        grid = (n_btiles, n_mtiles)
        dim_sems = ("parallel", "arbitrary")

    anchor_p = _pad_axis(anchor, 0, B_pad)
    contrast_p = _pad_axis(contrast, 0, M_pad)

    dot_precision = None
    if mxu_dtype is not None:
        anchor_p = anchor_p.astype(mxu_dtype)      # bf16 MXU fast path (default)
        contrast_p = contrast_p.astype(mxu_dtype)
    else:
        dot_precision = jax.lax.Precision.HIGHEST  # exact-f32 path

    kern = _make_supcon_kernel(
        inv_t=float(1.0 / temperature),
        block_b=block_b, block_m=block_m, n_mtiles=n_mtiles, M=M, M_pad=M_pad,
        dot_precision=dot_precision, explicit_mask=explicit_mask,
        streamed=not contrast_resident)

    in_arrays, in_specs = [], []
    if not explicit_mask:
        rowkey_p = _pad_axis(rowkey, 0, B_pad, value=-1.0)
        in_arrays.append(rowkey_p)
        in_specs.append(pl.BlockSpec(
            (block_b, 1),
            (lambda i: (i, 0)) if contrast_resident else (lambda i, k: (i, 0))))
        colinfo_p = _pad_axis(colinfo, 1, M_pad, value=-2.0)           # [1, M_pad]
        in_arrays.append(colinfo_p)
        in_specs.append(pl.BlockSpec(
            (1, block_m),
            (lambda i: (0, 0)) if contrast_resident else (lambda i, k: (0, k))))
    else:
        colinfo_p = _pad_axis(_pad_axis(colinfo, 1, M_pad), 0, B_pad)  # [B_pad, M_pad]
        in_arrays.append(colinfo_p)
        in_specs.append(pl.BlockSpec(
            (block_b, block_m),
            (lambda i: (i, 0)) if contrast_resident else (lambda i, k: (i, k))))
    in_arrays += [anchor_p, contrast_p]
    in_specs += [
        pl.BlockSpec((block_b, D),
                     (lambda i: (i, 0)) if contrast_resident else (lambda i, k: (i, 0))),
        # Resident: constant block index -> contrast DMA'd from HBM once, reused
        # across all B tiles.  Streamed: flash tiles over M.
        pl.BlockSpec((block_m, D),
                     (lambda i: (0, 0)) if contrast_resident else (lambda i, k: (k, 0))),
    ]

    out_shape = tuple(jax.ShapeDtypeStruct((1, B_pad), jnp.float32) for _ in range(2))
    out_idx = (lambda i: (0, i)) if contrast_resident else (lambda i, k: (0, i))
    out_specs = tuple(pl.BlockSpec((1, block_b), out_idx) for _ in range(2))

    scratch = [] if contrast_resident else [pltpu.VMEM((block_b, 1), jnp.float32)] * 3

    se_rows, sp_rows = pl.pallas_call(
        kern,
        out_shape=out_shape,
        grid=grid,
        in_specs=in_specs,
        out_specs=out_specs,
        scratch_shapes=scratch,
        compiler_params=pltpu.CompilerParams(
            dimension_semantics=dim_sems,
            vmem_limit_bytes=vmem_limit),
    )(*in_arrays)

    # ---- [B]-sized finalize math (functional mirror of the torch buffer ops) ----
    exp_sum = se_rows[0, :B].reshape(B, 1)       # sum_{j != i} exp(logits_ij)
    sum_pos = sp_rows[0, :B]                     # sum over positives of exp(logits)

    u_new = u_prev + exp_sum                                          # [B, 1]
    npos = jnp.where(npos < 1e-6, 1.0, npos)
    mean_prob_pos = sum_pos / (u_new[:, 0] * npos)                    # [B]
    v_new = v_prev + mean_prob_pos                                    # [B]
    loss = jnp.mean(-(temperature / base_temperature) * jnp.log(v_new))

    new_state = dict(
        u=u.at[index].set(u_new),
        f1_w=f1_w.at[index].set(exp_sum),
        v=v.at[index].set(v_new),
        f2_w=f2_w.at[index].set(mean_prob_pos),
    )
    return loss, new_state


# ---------------------------------------------------------------------------
# Pure-JAX mirror of the PyTorch forward (loss + updated buffers), for checking.
# ---------------------------------------------------------------------------
def _ref_forward(features, index, state, labels=None, mask=None,
                 gamma=0.9, temperature=0.07, base_temperature=0.07):
    B, V = features.shape[0], features.shape[1]
    feats = features.reshape(B, V, -1).astype(jnp.float32)
    D = feats.shape[-1]
    M = B * V
    if labels is None and mask is None:
        base = jnp.eye(B, dtype=jnp.float32)
    elif labels is not None:
        lab = jnp.asarray(labels).reshape(-1, 1)
        base = (lab == lab.T).astype(jnp.float32)
    else:
        base = mask.astype(jnp.float32)
    contrast = jnp.swapaxes(feats, 0, 1).reshape(M, D)
    anchor = feats[:, 0]
    adc = jnp.matmul(anchor, contrast.T,
                     precision=jax.lax.Precision.HIGHEST) / temperature
    logits = adc - jnp.max(adc, axis=1, keepdims=True)
    lmask = jnp.ones((B, M), jnp.float32).at[jnp.arange(B), jnp.arange(B)].set(0.0)
    msk = jnp.tile(base, (1, V)) * lmask
    exp_logits = jnp.exp(logits) * lmask
    u, v, f1_w, f2_w = state["u"], state["v"], state["f1_w"], state["f2_w"]
    g = jnp.where(jnp.sum(u[index]) == 0.0, 1.0, gamma)
    exp_sum = exp_logits.sum(1, keepdims=True)
    u_new = (1.0 - g) * (u[index] - f1_w[index]) + exp_sum
    prob = jnp.exp(logits) / u_new
    den = msk.sum(1)
    den = jnp.where(den < 1e-6, 1.0, den)
    mpp = (msk * prob).sum(1) / den
    v_new = (1.0 - g) * (v[index] - f2_w[index]) + mpp
    loss = -(temperature / base_temperature) * jnp.log(v_new)
    new_state = dict(
        u=u.at[index].set(u_new),
        f1_w=f1_w.at[index].set(exp_sum),
        v=v.at[index].set(v_new),
        f2_w=f2_w.at[index].set(mpp),
    )
    return loss.mean(), new_state


def _l2_normalize(x):
    flat = x.reshape(x.shape[0], x.shape[1], -1)
    flat = flat / jnp.linalg.norm(flat, axis=-1, keepdims=True)
    return flat.reshape(x.shape)


def _check(name, got, want, rtol, atol):
    if not bool(jnp.allclose(got, want, rtol=rtol, atol=atol)):
        raise AssertionError(f"{name} mismatch:\n pallas={got}\n ref={want}")


if __name__ == "__main__":
    key = jax.random.PRNGKey(0)
    N = 64                                  # state-table size (module default 50020)
    C, H, W = 4, 4, 2                       # feature dim D = 32

    k1, k2, k3, k4, k5, k6, k7 = jax.random.split(key, 7)
    zero_state = dict(u=jnp.zeros((N, 1), jnp.float32),
                      v=jnp.zeros((N,), jnp.float32),
                      f1_w=jnp.zeros((N, 1), jnp.float32),
                      f2_w=jnp.zeros((N,), jnp.float32))
    warm_state = dict(                       # exercises the gamma=0.9 branch
        u=jax.random.uniform(k4, (N, 1), jnp.float32, 0.5, 1.5),
        v=jax.random.uniform(k5, (N,), jnp.float32, 0.5, 1.5),
        f1_w=jax.random.uniform(k6, (N, 1), jnp.float32, 0.0, 0.3),
        f2_w=jax.random.uniform(k7, (N,), jnp.float32, 0.0, 0.3))

    TIGHT = (1e-3, 1e-5)     # exact-f32 (mxu_dtype=None) kernel vs f32 reference
    LOOSE = (0.2, 2e-2)      # default bf16 MXU kernel vs f32 reference (sanity)
    F32 = dict(mxu_dtype=None)
    STREAM = dict(contrast_resident=False, block_m_max=128)

    def run_case(name, feats_in, idx, st, fwd_kwargs, impl_kwargs, tol):
        loss, new_state = supcon_forward(feats_in, idx, st, **fwd_kwargs,
                                         **impl_kwargs)
        jax.block_until_ready(loss)
        jax.block_until_ready(new_state)
        ref_loss, ref_state = _ref_forward(feats_in, idx, st, **fwd_kwargs)
        rtol, atol = tol
        _check(f"{name}: loss", loss, ref_loss, rtol, atol)
        for field in ("u", "v", "f1_w", "f2_w"):
            _check(f"{name}: state[{field}]", new_state[field],
                   ref_state[field], rtol, atol)

    # --- resident-contrast path (small B, M) -------------------------------
    B, V = 8, 2                              # M = 16
    feats_a = _l2_normalize(jax.random.normal(k1, (B, V, C, H, W), jnp.float32))
    feats_b = _l2_normalize(jax.random.normal(k2, (B, V, C, H, W), jnp.float32))
    index_a = (jnp.arange(B, dtype=jnp.int32) * 3) % N
    labels_a = jnp.array([0, 1, 0, 1, 2, 2, 3, 0], dtype=jnp.int32)
    mask_a = (labels_a[:, None] == labels_a[None, :]).astype(jnp.float32)

    run_case("simclr_cold_f32", feats_a, index_a, zero_state, {}, F32, TIGHT)
    run_case("labels_cold_f32", feats_a, index_a, zero_state,
             dict(labels=labels_a), F32, TIGHT)
    run_case("mask_warm_f32", feats_b, index_a, warm_state,
             dict(mask=mask_a), F32, TIGHT)
    run_case("simclr_warm_bf16", feats_b, index_a, warm_state, {}, {}, LOOSE)
    run_case("labels_warm_bf16", feats_b, index_a, warm_state,
             dict(labels=labels_a), {}, LOOSE)

    # --- streamed (flash-over-M) fallback path, forced ----------------------
    B2, V2 = 48, 4                           # M = 192 -> two 128-wide M tiles
    feats_c = _l2_normalize(jax.random.normal(k3, (B2, V2, C, H, W), jnp.float32))
    index_c = (jnp.arange(B2, dtype=jnp.int32) * 3) % N
    labels_c = jnp.arange(B2, dtype=jnp.int32) % 5
    mask_c = (labels_c[:, None] == labels_c[None, :]).astype(jnp.float32)

    run_case("stream_labels_cold_f32", feats_c, index_c, zero_state,
             dict(labels=labels_c), {**F32, **STREAM}, TIGHT)
    run_case("stream_mask_warm_f32", feats_c, index_c, warm_state,
             dict(mask=mask_c), {**F32, **STREAM}, TIGHT)
    run_case("stream_simclr_warm_bf16", feats_c, index_c, warm_state,
             {}, dict(STREAM), LOOSE)

    print("KERNEL_OK")
</pallas_src>

<mosaic_0001>
module attributes {stable_mosaic.version = 11 : i64} {
  func.func @kernel(%arg0: i32, %arg1: memref<8x1xf32, #tpu.memory_space<vmem>>, %arg2: memref<1x16xf32, #tpu.memory_space<vmem>>, %arg3: memref<8x32xf32, #tpu.memory_space<vmem>>, %arg4: memref<16x32xf32, #tpu.memory_space<vmem>>, %arg5: memref<1x8xf32, #tpu.memory_space<vmem>>, %arg6: memref<1x8xf32, #tpu.memory_space<vmem>>) attributes {dimension_semantics = [#tpu.dimension_semantics<parallel>], iteration_bounds = array<i64: 1>, scalar_prefetch = 0 : i64, scratch_operands = 0 : i64, tpu.core_type = #tpu.core_type<tc>, window_params = [{transform_indices = @transform_0, window_bounds = array<i64: 8, 1>}, {pipeline_mode = #tpu.pipeline_mode<synchronous>, transform_indices = @transform_1, window_bounds = array<i64: 1, 16>}, {transform_indices = @transform_2, window_bounds = array<i64: 8, 32>}, {pipeline_mode = #tpu.pipeline_mode<synchronous>, transform_indices = @transform_3, window_bounds = array<i64: 16, 32>}, {transform_indices = @transform_4, window_bounds = array<i64: 1, 8>}, {transform_indices = @transform_5, window_bounds = array<i64: 1, 8>}]} {
    %c0 = arith.constant 0 : index
    %c0_0 = arith.constant 0 : index
    %0 = vector.load %arg1[%c0, %c0_0] : memref<8x1xf32, #tpu.memory_space<vmem>>, vector<8x1xf32>
    %c0_1 = arith.constant 0 : index
    %c0_2 = arith.constant 0 : index
    %1 = vector.load %arg3[%c0_1, %c0_2] : memref<8x32xf32, #tpu.memory_space<vmem>>, vector<8x32xf32>
    %cst = arith.constant 14.2857141 : f32
    %2 = vector.broadcast %cst : f32 to vector<8x32xf32>
    %3 = arith.mulf %1, %2 : vector<8x32xf32>
    %c0_3 = arith.constant 0 : index
    %c0_4 = arith.constant 0 : index
    %4 = vector.load %arg4[%c0_3, %c0_4] : memref<16x32xf32, #tpu.memory_space<vmem>>, vector<16x32xf32>
    %cst_5 = arith.constant dense<0.000000e+00> : vector<8x16xf32>
    %5 = tpu.matmul %3, %4, %cst_5 {dimension_numbers = #tpu.dot_dimension_numbers<[1], [1], [0], [0], [0, 0, 1, 0], [], []>, precision = #tpu.contract_precision<fp32>} : vector<8x32xf32>, vector<16x32xf32>, vector<8x16xf32> -> vector<8x16xf32>
    %cst_6 = arith.constant dense<0xFF800000> : vector<8xf32>
    %6 = vector.multi_reduction <maximumf>, %5, %cst_6 [1] : vector<8x16xf32> to vector<8xf32>
    %7 = vector.shape_cast %6 : vector<8xf32> to vector<8x1xf32>
    %8 = tpu.iota {dimensions = array<i32: 0>} : vector<8x1xi32>
    %c8_i32 = arith.constant 8 : i32
    %9 = arith.muli %arg0, %c8_i32 : i32
    %10 = vector.broadcast %9 : i32 to vector<8x1xi32>
    %11 = arith.addi %8, %10 : vector<8x1xi32>
    %12 = tpu.iota {dimensions = array<i32: 1>} : vector<1x16xi32>
    %c0_i32 = arith.constant 0 : i32
    %13 = vector.broadcast %c0_i32 : i32 to vector<1x16xi32>
    %14 = arith.addi %12, %13 : vector<1x16xi32>
    %15 = vector.broadcast %14 : vector<1x16xi32> to vector<8x16xi32>
    %16 = vector.broadcast %11 : vector<8x1xi32> to vector<8x16xi32>
    %17 = arith.cmpi ne, %15, %16 : vector<8x16xi32>
    %cst_7 = arith.constant -1.000000e+30 : f32
    %18 = vector.broadcast %cst_7 : f32 to vector<8x16xf32>
    %19 = arith.select %17, %5, %18 : vector<8x16xi1>, vector<8x16xf32>
    %20 = vector.broadcast %7 : vector<8x1xf32> to vector<8x16xf32>
    %21 = arith.subf %19, %20 : vector<8x16xf32>
    %22 = math.exp %21 : vector<8x16xf32>
    %cst_8 = arith.constant dense<0.000000e+00> : vector<8xf32>
    %23 = vector.multi_reduction <add>, %22, %cst_8 [1] : vector<8x16xf32> to vector<8xf32>
    %24 = vector.shape_cast %23 : vector<8xf32> to vector<8x1xf32>
    %25 = vector.shape_cast %24 : vector<8x1xf32> to vector<1x8xf32>
    %c0_9 = arith.constant 0 : index
    %c0_10 = arith.constant 0 : index
    %26 = vector.load %arg5[%c0_9, %c0_10] : memref<1x8xf32, #tpu.memory_space<vmem>>, vector<1x8xf32>
    tpu.vector_store %arg5[%c0_9, %c0_10], %25 {strides = array<i32>} : memref<1x8xf32, #tpu.memory_space<vmem>>, vector<1x8xf32>,
    %c0_11 = arith.constant 0 : index
    %c0_12 = arith.constant 0 : index
    %27 = vector.load %arg2[%c0_11, %c0_12] : memref<1x16xf32, #tpu.memory_space<vmem>>, vector<1x16xf32>
    %28 = vector.broadcast %0 : vector<8x1xf32> to vector<8x16xf32>
    %29 = vector.broadcast %27 : vector<1x16xf32> to vector<8x16xf32>
    %30 = arith.cmpf oeq, %28, %29 : vector<8x16xf32>
    %cst_13 = arith.constant 0.000000e+00 : f32
    %31 = vector.broadcast %cst_13 : f32 to vector<8x16xf32>
    %32 = arith.select %30, %22, %31 : vector<8x16xi1>, vector<8x16xf32>
    %cst_14 = arith.constant dense<0.000000e+00> : vector<8xf32>
    %33 = vector.multi_reduction <add>, %32, %cst_14 [1] : vector<8x16xf32> to vector<8xf32>
    %34 = vector.shape_cast %33 : vector<8xf32> to vector<8x1xf32>
    %35 = vector.shape_cast %34 : vector<8x1xf32> to vector<1x8xf32>
    %c0_15 = arith.constant 0 : index
    %c0_16 = arith.constant 0 : index
    %36 = vector.load %arg6[%c0_15, %c0_16] : memref<1x8xf32, #tpu.memory_space<vmem>>, vector<1x8xf32>
    tpu.vector_store %arg6[%c0_15, %c0_16], %35 {strides = array<i32>} : memref<1x8xf32, #tpu.memory_space<vmem>>, vector<1x8xf32>,
    return
  }
  func.func @transform_0(%arg0: i32) -> (i32, i32) {
    %c0_i32 = arith.constant 0 : i32
    %c0_i32_0 = arith.constant 0 : i32
    return %arg0, %c0_i32 : i32, i32
  }
  func.func @transform_1(%arg0: i32) -> (i32, i32) {
    %c0_i32 = arith.constant 0 : i32
    %c0_i32_0 = arith.constant 0 : i32
    %c0_i32_1 = arith.constant 0 : i32
    return %c0_i32, %c0_i32_0 : i32, i32
  }
  func.func @transform_2(%arg0: i32) -> (i32, i32) {
    %c0_i32 = arith.constant 0 : i32
    %c0_i32_0 = arith.constant 0 : i32
    return %arg0, %c0_i32 : i32, i32
  }
  func.func @transform_3(%arg0: i32) -> (i32, i32) {
    %c0_i32 = arith.constant 0 : i32
    %c0_i32_0 = arith.constant 0 : i32
    %c0_i32_1 = arith.constant 0 : i32
    return %c0_i32, %c0_i32_0 : i32, i32
  }
  func.func @transform_4(%arg0: i32) -> (i32, i32) {
    %c0_i32 = arith.constant 0 : i32
    %c0_i32_0 = arith.constant 0 : i32
    return %c0_i32, %arg0 : i32, i32
  }
  func.func @transform_5(%arg0: i32) -> (i32, i32) {
    %c0_i32 = arith.constant 0 : i32
    %c0_i32_0 = arith.constant 0 : i32
    return %c0_i32, %arg0 : i32, i32
  }
}

</mosaic_0001>

<llo_original>
// kernel: tpu_custom_call.1
$region0: #{tpu_custom_call.1}
  #allocation0 [shape = 'u32[]', space=smem, size = 0x4, offset = 0x4, fixed_abs, tag = 'smem constant byte address 0x4 - core index']
  #allocation1 [shape = 'u32[144,128]{1,0:T(1,128)}', space=vmem, size = 0x12000, scoped, tag = 'internal scratch']
  %s0 = inlined_call_operand.vmem [shape: f32[8,1], index: 0, kind: input, shape index: {}]
  %s1 = inlined_call_operand.vmem [shape: f32[1,16], index: 1, kind: input, shape index: {}]
  %s2 = inlined_call_operand.hbm [shape: f32[8,32], index: 2, kind: input, shape index: {}]
  %s3 = inlined_call_operand.vmem [shape: f32[16,32], index: 3, kind: input, shape index: {}]
  %s4 = inlined_call_operand.hbm [shape: f32[1,8], index: 4, kind: output, shape index: {0}]
  %s5 = inlined_call_operand.hbm [shape: f32[1,8], index: 5, kind: output, shape index: {1}]
  %6 = xla_tuple %s4, %s5
  %s7 = sld [smem:[#allocation0]]
  $region38: #{tpu_custom_call.1} parent=0
    _
  %s9 = ssub.s32 1, %s7
  %s10 = scalar_select 0, %s9, %s7
  $region1: #{tpu_custom_call.1} parent=0
    #allocation2 [shape = 'u8[4096]{0}', space=vmem, size = 0x1000, scoped, tag = 'input window, operand 2, single buffered']
    #allocation3 [shape = 's32[1]{0}', space=sflag, size = 0x4, scoped, tag = 'scoped memory for tpu_custom_call.1']
    #allocation4 [shape = 's32[1]{0}', space=sflag, size = 0x4, scoped, tag = 'scoped memory for tpu_custom_call.1']
    #allocation5 [shape = 'u8[512]{0}', space=vmem, size = 0x400, scoped, tag = 'output window, operand 0, single buffered']
    #allocation6 [shape = 'u8[512]{0}', space=vmem, size = 0x400, scoped, tag = 'output window, operand 1, single buffered']
    #allocation7 [shape = 's32[1]{0}', space=sflag, size = 0x4, scoped, tag = 'scoped memory for tpu_custom_call.1']
    %11 = vsyncpa [#allocation3], 0
    %12 = vsyncpa [#allocation4], 0
    %13 = vsyncpa [#allocation7], 0
    // Predicated region
    $region2: #{tpu_custom_call.1} parent=1 // pred_check
      _
    $region3: #{tpu_custom_call.1} parent=1 // pred_check_branch
      %15 = sbr.rel (0) target = $region5
    $region4: #{tpu_custom_call.1} parent=1 // pred_region
      _
    $region5: #{tpu_custom_call.1} parent=1 // pred_fallthru
      _
    // Predicated region
    $region6: #{tpu_custom_call.1} parent=1 // pred_check
      _
    $region7: #{tpu_custom_call.1} parent=1 // pred_check_branch
      %17 = sbr.rel (0) target = $region9
    $region8: #{tpu_custom_call.1} parent=1 // pred_region
      _
    $region9: #{tpu_custom_call.1} parent=1 // pred_fallthru
      _
    // Predicated region
    $region10: #{tpu_custom_call.1} parent=1 // pred_check
      _
    $region11: #{tpu_custom_call.1} parent=1 // pred_check_branch
      %19 = sbr.rel (0) target = $region13
    $region12: #{tpu_custom_call.1} parent=1 // pred_region
      %s21 = ssub.s32 128, 128
      %22 = vsyncadd [#allocation3], %s21
      %s24 = sshll.u32 [#allocation2], 4
      %s25 = int_to_ptr.vmem [resolvable:$true] %s24
      %27 = dma.hbm_to_vmem [thread:$0]  %s2, 128, %s25, [#allocation3]
    $region13: #{tpu_custom_call.1} parent=1 // pred_fallthru
      _
    // Predicated region
    $region14: #{tpu_custom_call.1} parent=1 // pred_check
      _
    $region15: #{tpu_custom_call.1} parent=1 // pred_check_branch
      %29 = sbr.rel (0) target = $region17
    $region16: #{tpu_custom_call.1} parent=1 // pred_region
      _
    $region17: #{tpu_custom_call.1} parent=1 // pred_fallthru
      _
    // Predicated region
    $region18: #{tpu_custom_call.1} parent=1 // pred_check
      _
    $region19: #{tpu_custom_call.1} parent=1 // pred_check_branch
      %31 = sbr.rel (0) target = $region21
    $region20: #{tpu_custom_call.1} parent=1 // pred_region
      %32 = dma.done [#allocation3], 128
    $region21: #{tpu_custom_call.1} parent=1 // pred_fallthru
      _
    %v33 = vld [vmem:[%s0] sm:$0xff]
    %v34 = vld [vmem:[#allocation2] sm:$0xff]
    %v35 = vmul.f32 %v34, 14.285714
    %v36 = vld [vmem:[%s3] sm:$0xff]
    %v37 = vld [vmem:[%s3 + $0x8] sm:$0xff]
    %vm38 = vcmask 261120
    %v40 = vsel %vm38, %v35, 0
    %v43 = vsel %vm38, %v36, 0
    %v46 = vsel %vm38, %v37, 0
    %48 = vmatprep.subr.mxu0 0.0
    %v49 = vand.u32 %v43, 4294901760
    %50 = vmatpush1.xpose.msra.mxu0 %v49
    %51 = vmatprep.subr.mxu0 0.0
    %v52 = vand.u32 %v46, 4294901760
    %53 = vmatpush1.xpose.msra.mxu0 %v52
    %54 = vmatprep.subr.mxu0 0.0
    %55 = vmatpush1.xpose.msra.mxu0 0.0
    %56 = vmatprep.subr.mxu0 0.0
    %57 = vmatpush1.xpose.msra.mxu0 0.0
    %58 = vmatprep.subr.mxu0 0.0
    %59 = vmatpush1.xpose.msra.mxu0 0.0
    %60 = vmatprep.subr.mxu0 0.0
    %61 = vmatpush1.xpose.msra.mxu0 0.0
    %62 = vmatprep.subr.mxu0 0.0
    %63 = vmatpush1.xpose.msra.mxu0 0.0
    %64 = vmatprep.subr.mxu0 0.0
    %65 = vmatpush1.xpose.msra.mxu0 0.0
    %66 = vmatprep.subr.mxu0 0.0
    %67 = vmatpush1.xpose.msra.mxu0 0.0
    %68 = vmatprep.subr.mxu0 0.0
    %69 = vmatpush1.xpose.msra.mxu0 0.0
    %70 = vmatprep.subr.mxu0 0.0
    %71 = vmatpush1.xpose.msra.mxu0 0.0
    %72 = vmatprep.subr.mxu0 0.0
    %73 = vmatpush1.xpose.msra.mxu0 0.0
    %74 = vmatprep.subr.mxu0 0.0
    %75 = vmatpush1.xpose.msra.mxu0 0.0
    %76 = vmatprep.subr.mxu0 0.0
    %77 = vmatpush1.xpose.msra.mxu0 0.0
    %78 = vmatprep.subr.mxu0 0.0
    %79 = vmatpush1.xpose.msra.mxu0 0.0
    %80 = vmatprep.subr.mxu0 0.0
    %81 = vmatpush1.xpose.msra.mxu0 0.0
    %82 = vmatprep.subr.mxu0 0.0
    %83 = vmatpush1.xpose.msra.mxu0 0.0
    %84 = vmatprep.subr.mxu0 0.0
    %85 = vmatpush1.xpose.msra.mxu0 0.0
    %86 = vmatprep.subr.mxu0 0.0
    %87 = vmatpush1.xpose.msra.mxu0 0.0
    %88 = vmatprep.subr.mxu0 0.0
    %89 = vmatpush1.xpose.msra.mxu0 0.0
    %90 = vmatprep.subr.mxu0 0.0
    %91 = vmatpush1.xpose.msra.mxu0 0.0
    %92 = vmatprep.subr.mxu0 0.0
    %93 = vmatpush1.xpose.msra.mxu0 0.0
    %94 = vmatprep.subr.mxu0 0.0
    %95 = vmatpush1.xpose.msra.mxu0 0.0
    %96 = vmatprep.subr.mxu0 0.0
    %97 = vmatpush1.xpose.msra.mxu0 0.0
    %98 = vmatprep.subr.mxu0 0.0
    %99 = vmatpush1.xpose.msra.mxu0 0.0
    %100 = vmatprep.subr.mxu0 0.0
    %101 = vmatpush1.xpose.msra.mxu0 0.0
    %102 = vmatprep.subr.mxu0 0.0
    %103 = vmatpush1.xpose.msra.mxu0 0.0
    %104 = vmatprep.subr.mxu0 0.0
    %105 = vmatpush1.xpose.msra.mxu0 0.0
    %106 = vmatprep.subr.mxu0 0.0
    %107 = vmatpush1.xpose.msra.mxu0 0.0
    %108 = vmatprep.subr.mxu0 0.0
    %109 = vmatpush1.xpose.msra.mxu0 0.0
    %110 = vmatprep.subr.mxu0 0.0
    %111 = vmatpush1.xpose.msra.mxu0 0.0
    %112 = vmatprep.subr.mxu0 0.0
    %113 = vmatpush1.xpose.msra.mxu0 0.0
    %114 = vmatprep.mubr.f32.mxu0 0.0
    %v115 = vand.u32 %v40, 4294901760
    %v116 = vsub.f32 %v40, %v115
    %v117 = vand.u32 %v116, 4294901760
    %v118 = vsub.f32 %v116, %v117
    %v119 = vand.u32 %v118, 4294901760
    %120 = vmatmul.mubr.f32.gmra.mrb[0].mxu0 %v119
    %v121 = vpop.f32.mrb[0].mxu0
    %v122 = vadd.f32 0.0, %v121
    %v123 = vpop.f32.mrb[0].mxu0
    %124 = vdwg.mxu0
    %125 = vmatprep.subr.mxu0 0.0
    %v126 = vand.u32 %v43, 4294901760
    %v127 = vsub.f32 %v43, %v126
    %v128 = vand.u32 %v127, 4294901760
    %v129 = vsub.f32 %v127, %v128
    %v130 = vand.u32 %v129, 4294901760
    %131 = vmatpush1.xpose.msra.mxu0 %v130
    %132 = vmatprep.subr.mxu0 0.0
    %v133 = vand.u32 %v46, 4294901760
    %v134 = vsub.f32 %v46, %v133
    %v135 = vand.u32 %v134, 4294901760
    %v136 = vsub.f32 %v134, %v135
    %v137 = vand.u32 %v136, 4294901760
    %138 = vmatpush1.xpose.msra.mxu0 %v137
    %139 = vmatprep.subr.mxu0 0.0
    %140 = vmatpush1.xpose.msra.mxu0 0.0
    %141 = vmatprep.subr.mxu0 0.0
    %142 = vmatpush1.xpose.msra.mxu0 0.0
    %143 = vmatprep.subr.mxu0 0.0
    %144 = vmatpush1.xpose.msra.mxu0 0.0
    %145 = vmatprep.subr.mxu0 0.0
    %146 = vmatpush1.xpose.msra.mxu0 0.0
    %147 = vmatprep.subr.mxu0 0.0
    %148 = vmatpush1.xpose.msra.mxu0 0.0
    %149 = vmatprep.subr.mxu0 0.0
    %150 = vmatpush1.xpose.msra.mxu0 0.0
    %151 = vmatprep.subr.mxu0 0.0
    %152 = vmatpush1.xpose.msra.mxu0 0.0
    %153 = vmatprep.subr.mxu0 0.0
    %154 = vmatpush1.xpose.msra.mxu0 0.0
    %155 = vmatprep.subr.mxu0 0.0
    %156 = vmatpush1.xpose.msra.mxu0 0.0
    %157 = vmatprep.subr.mxu0 0.0
    %158 = vmatpush1.xpose.msra.mxu0 0.0
    %159 = vmatprep.subr.mxu0 0.0
    %160 = vmatpush1.xpose.msra.mxu0 0.0
    %161 = vmatprep.subr.mxu0 0.0
    %162 = vmatpush1.xpose.msra.mxu0 0.0
    %163 = vmatprep.subr.mxu0 0.0
    %164 = vmatpush1.xpose.msra.mxu0 0.0
    %165 = vmatprep.subr.mxu0 0.0
    %166 = vmatpush1.xpose.msra.mxu0 0.0
    %167 = vmatprep.subr.mxu0 0.0
    %168 = vmatpush1.xpose.msra.mxu0 0.0
    %169 = vmatprep.subr.mxu0 0.0
    %170 = vmatpush1.xpose.msra.mxu0 0.0
    %171 = vmatprep.subr.mxu0 0.0
    %172 = vmatpush1.xpose.msra.mxu0 0.0
    %173 = vmatprep.subr.mxu0 0.0
    %174 = vmatpush1.xpose.msra.mxu0 0.0
    %175 = vmatprep.subr.mxu0 0.0
    %176 = vmatpush1.xpose.msra.mxu0 0.0
    %177 = vmatprep.subr.mxu0 0.0
    %178 = vmatpush1.xpose.msra.mxu0 0.0
    %179 = vmatprep.subr.mxu0 0.0
    %180 = vmatpush1.xpose.msra.mxu0 0.0
    %181 = vmatprep.subr.mxu0 0.0
    %182 = vmatpush1.xpose.msra.mxu0 0.0
    %183 = vmatprep.subr.mxu0 0.0
    %184 = vmatpush1.xpose.msra.mxu0 0.0
    %185 = vmatprep.subr.mxu0 0.0
    %186 = vmatpush1.xpose.msra.mxu0 0.0
    %187 = vmatprep.subr.mxu0 0.0
    %188 = vmatpush1.xpose.msra.mxu0 0.0
    %189 = vmatprep.subr.mxu0 0.0
    %190 = vmatpush1.xpose.msra.mxu0 0.0
    %191 = vmatprep.subr.mxu0 0.0
    %192 = vmatpush1.xpose.msra.mxu0 0.0
    %193 = vmatprep.subr.mxu0 0.0
    %194 = vmatpush1.xpose.msra.mxu0 0.0
    %195 = vmatprep.subr.mxu0 0.0
    %196 = vmatpush1.xpose.msra.mxu0 0.0
    %197 = vmatprep.subr.mxu0 0.0
    %198 = vmatpush1.xpose.msra.mxu0 0.0
    %199 = vmatprep.mubr.f32.mxu0 0.0
    %v200 = vand.u32 %v40, 4294901760
    %201 = vmatmul.mubr.f32.gmra.mrb[0].mxu0 %v200
    %v202 = vpop.f32.mrb[0].mxu0
    %v203 = vadd.f32 %v122, %v202
    %v204 = vpop.f32.mrb[0].mxu0
    %205 = vdwg.mxu0
    %206 = vmatprep.subr.mxu0 0.0
    %v207 = vand.u32 %v43, 4294901760
    %v208 = vsub.f32 %v43, %v207
    %209 = vmatpush1.xpose.msra.mxu0 %v208
    %210 = vmatprep.subr.mxu0 0.0
    %v211 = vand.u32 %v46, 4294901760
    %v212 = vsub.f32 %v46, %v211
    %213 = vmatpush1.xpose.msra.mxu0 %v212
    %214 = vmatprep.subr.mxu0 0.0
    %215 = vmatpush1.xpose.msra.mxu0 0.0
    %216 = vmatprep.subr.mxu0 0.0
    %217 = vmatpush1.xpose.msra.mxu0 0.0
    %218 = vmatprep.subr.mxu0 0.0
    %219 = vmatpush1.xpose.msra.mxu0 0.0
    %220 = vmatprep.subr.mxu0 0.0
    %221 = vmatpush1.xpose.msra.mxu0 0.0
    %222 = vmatprep.subr.mxu0 0.0
    %223 = vmatpush1.xpose.msra.mxu0 0.0
    %224 = vmatprep.subr.mxu0 0.0
    %225 = vmatpush1.xpose.msra.mxu0 0.0
    %226 = vmatprep.subr.mxu0 0.0
    %227 = vmatpush1.xpose.msra.mxu0 0.0
    %228 = vmatprep.subr.mxu0 0.0
    %229 = vmatpush1.xpose.msra.mxu0 0.0
    %230 = vmatprep.subr.mxu0 0.0
    %231 = vmatpush1.xpose.msra.mxu0 0.0
    %232 = vmatprep.subr.mxu0 0.0
    %233 = vmatpush1.xpose.msra.mxu0 0.0
    %234 = vmatprep.subr.mxu0 0.0
    %235 = vmatpush1.xpose.msra.mxu0 0.0
    %236 = vmatprep.subr.mxu0 0.0
    %237 = vmatpush1.xpose.msra.mxu0 0.0
    %238 = vmatprep.subr.mxu0 0.0
    %239 = vmatpush1.xpose.msra.mxu0 0.0
    %240 = vmatprep.subr.mxu0 0.0
    %241 = vmatpush1.xpose.msra.mxu0 0.0
    %242 = vmatprep.subr.mxu0 0.0
    %243 = vmatpush1.xpose.msra.mxu0 0.0
    %244 = vmatprep.subr.mxu0 0.0
    %245 = vmatpush1.xpose.msra.mxu0 0.0
    %246 = vmatprep.subr.mxu0 0.0
    %247 = vmatpush1.xpose.msra.mxu0 0.0
    %248 = vmatprep.subr.mxu0 0.0
    %249 = vmatpush1.xpose.msra.mxu0 0.0
    %250 = vmatprep.subr.mxu0 0.0
    %251 = vmatpush1.xpose.msra.mxu0 0.0
    %252 = vmatprep.subr.mxu0 0.0
    %253 = vmatpush1.xpose.msra.mxu0 0.0
    %254 = vmatprep.subr.mxu0 0.0
    %255 = vmatpush1.xpose.msra.mxu0 0.0
    %256 = vmatprep.subr.mxu0 0.0
    %257 = vmatpush1.xpose.msra.mxu0 0.0
    %258 = vmatprep.subr.mxu0 0.0
    %259 = vmatpush1.xpose.msra.mxu0 0.0
    %260 = vmatprep.subr.mxu0 0.0
    %261 = vmatpush1.xpose.msra.mxu0 0.0
    %262 = vmatprep.subr.mxu0 0.0
    %263 = vmatpush1.xpose.msra.mxu0 0.0
    %264 = vmatprep.subr.mxu0 0.0
    %265 = vmatpush1.xpose.msra.mxu0 0.0
    %266 = vmatprep.subr.mxu0 0.0
    %267 = vmatpush1.xpose.msra.mxu0 0.0
    %268 = vmatprep.subr.mxu0 0.0
    %269 = vmatpush1.xpose.msra.mxu0 0.0
    %270 = vmatprep.subr.mxu0 0.0
    %271 = vmatpush1.xpose.msra.mxu0 0.0
    %272 = vmatprep.subr.mxu0 0.0
    %273 = vmatpush1.xpose.msra.mxu0 0.0
    %274 = vmatprep.mubr.f32.mxu0 0.0
    %v275 = vand.u32 %v40, 4294901760
    %v276 = vsub.f32 %v40, %v275
    %277 = vmatmul.mubr.f32.gmra.mrb[0].mxu0 %v276
    %v278 = vpop.f32.mrb[0].mxu0
    %v279 = vadd.f32 %v203, %v278
    %v280 = vpop.f32.mrb[0].mxu0
    %281 = vdwg.mxu0
    %282 = vmatprep.subr.mxu0 0.0
    %v283 = vand.u32 %v43, 4294901760
    %284 = vmatpush1.xpose.msra.mxu0 %v283
    %285 = vmatprep.subr.mxu0 0.0
    %v286 = vand.u32 %v46, 4294901760
    %287 = vmatpush1.xpose.msra.mxu0 %v286
    %288 = vmatprep.subr.mxu0 0.0
    %289 = vmatpush1.xpose.msra.mxu0 0.0
    %290 = vmatprep.subr.mxu0 0.0
    %291 = vmatpush1.xpose.msra.mxu0 0.0
    %292 = vmatprep.subr.mxu0 0.0
    %293 = vmatpush1.xpose.msra.mxu0 0.0
    %294 = vmatprep.subr.mxu0 0.0
    %295 = vmatpush1.xpose.msra.mxu0 0.0
    %296 = vmatprep.subr.mxu0 0.0
    %297 = vmatpush1.xpose.msra.mxu0 0.0
    %298 = vmatprep.subr.mxu0 0.0
    %299 = vmatpush1.xpose.msra.mxu0 0.0
    %300 = vmatprep.subr.mxu0 0.0
    %301 = vmatpush1.xpose.msra.mxu0 0.0
    %302 = vmatprep.subr.mxu0 0.0
    %303 = vmatpush1.xpose.msra.mxu0 0.0
    %304 = vmatprep.subr.mxu0 0.0
    %305 = vmatpush1.xpose.msra.mxu0 0.0
    %306 = vmatprep.subr.mxu0 0.0
    %307 = vmatpush1.xpose.msra.mxu0 0.0
    %308 = vmatprep.subr.mxu0 0.0
    %309 = vmatpush1.xpose.msra.mxu0 0.0
    %310 = vmatprep.subr.mxu0 0.0
    %311 = vmatpush1.xpose.msra.mxu0 0.0
    %312 = vmatprep.subr.mxu0 0.0
    %313 = vmatpush1.xpose.msra.mxu0 0.0
    %314 = vmatprep.subr.mxu0 0.0
    %315 = vmatpush1.xpose.msra.mxu0 0.0
    %316 = vmatprep.subr.mxu0 0.0
    %317 = vmatpush1.xpose.msra.mxu0 0.0
    %318 = vmatprep.subr.mxu0 0.0
    %319 = vmatpush1.xpose.msra.mxu0 0.0
    %320 = vmatprep.subr.mxu0 0.0
    %321 = vmatpush1.xpose.msra.mxu0 0.0
    %322 = vmatprep.subr.mxu0 0.0
    %323 = vmatpush1.xpose.msra.mxu0 0.0
    %324 = vmatprep.subr.mxu0 0.0
    %325 = vmatpush1.xpose.msra.mxu0 0.0
    %326 = vmatprep.subr.mxu0 0.0
    %327 = vmatpush1.xpose.msra.mxu0 0.0
    %328 = vmatprep.subr.mxu0 0.0
    %329 = vmatpush1.xpose.msra.mxu0 0.0
    %330 = vmatprep.subr.mxu0 0.0
    %331 = vmatpush1.xpose.msra.mxu0 0.0
    %332 = vmatprep.subr.mxu0 0.0
    %333 = vmatpush1.xpose.msra.mxu0 0.0
    %334 = vmatprep.subr.mxu0 0.0
    %335 = vmatpush1.xpose.msra.mxu0 0.0
    %336 = vmatprep.subr.mxu0 0.0
    %337 = vmatpush1.xpose.msra.mxu0 0.0
    %338 = vmatprep.subr.mxu0 0.0
    %339 = vmatpush1.xpose.msra.mxu0 0.0
    %340 = vmatprep.subr.mxu0 0.0
    %341 = vmatpush1.xpose.msra.mxu0 0.0
    %342 = vmatprep.subr.mxu0 0.0
    %343 = vmatpush1.xpose.msra.mxu0 0.0
    %344 = vmatprep.subr.mxu0 0.0
    %345 = vmatpush1.xpose.msra.mxu0 0.0
    %346 = vmatprep.subr.mxu0 0.0
    %347 = vmatpush1.xpose.msra.mxu0 0.0
    %348 = vmatprep.mubr.f32.mxu0 0.0
    %v349 = vand.u32 %v40, 4294901760
    %v350 = vsub.f32 %v40, %v349
    %v351 = vand.u32 %v350, 4294901760
    %352 = vmatmul.mubr.f32.gmra.mrb[0].mxu0 %v351
    %v353 = vpop.f32.mrb[0].mxu0
    %v354 = vadd.f32 %v279, %v353
    %v355 = vpop.f32.mrb[0].mxu0
    %356 = vdwg.mxu0
    %357 = vmatprep.subr.mxu0 0.0
    %v358 = vand.u32 %v43, 4294901760
    %v359 = vsub.f32 %v43, %v358
    %v360 = vand.u32 %v359, 4294901760
    %361 = vmatpush1.xpose.msra.mxu0 %v360
    %362 = vmatprep.subr.mxu0 0.0
    %v363 = vand.u32 %v46, 4294901760
    %v364 = vsub.f32 %v46, %v363
    %v365 = vand.u32 %v364, 4294901760
    %366 = vmatpush1.xpose.msra.mxu0 %v365
    %367 = vmatprep.subr.mxu0 0.0
    %368 = vmatpush1.xpose.msra.mxu0 0.0
    %369 = vmatprep.subr.mxu0 0.0
    %370 = vmatpush1.xpose.msra.mxu0 0.0
    %371 = vmatprep.subr.mxu0 0.0
    %372 = vmatpush1.xpose.msra.mxu0 0.0
    %373 = vmatprep.subr.mxu0 0.0
    %374 = vmatpush1.xpose.msra.mxu0 0.0
    %375 = vmatprep.subr.mxu0 0.0
    %376 = vmatpush1.xpose.msra.mxu0 0.0
    %377 = vmatprep.subr.mxu0 0.0
    %378 = vmatpush1.xpose.msra.mxu0 0.0
    %379 = vmatprep.subr.mxu0 0.0
    %380 = vmatpush1.xpose.msra.mxu0 0.0
    %381 = vmatprep.subr.mxu0 0.0
    %382 = vmatpush1.xpose.msra.mxu0 0.0
    %383 = vmatprep.subr.mxu0 0.0
    %384 = vmatpush1.xpose.msra.mxu0 0.0
    %385 = vmatprep.subr.mxu0 0.0
    %386 = vmatpush1.xpose.msra.mxu0 0.0
    %387 = vmatprep.subr.mxu0 0.0
    %388 = vmatpush1.xpose.msra.mxu0 0.0
    %389 = vmatprep.subr.mxu0 0.0
    %390 = vmatpush1.xpose.msra.mxu0 0.0
    %391 = vmatprep.subr.mxu0 0.0
    %392 = vmatpush1.xpose.msra.mxu0 0.0
    %393 = vmatprep.subr.mxu0 0.0
    %394 = vmatpush1.xpose.msra.mxu0 0.0
    %395 = vmatprep.subr.mxu0 0.0
    %396 = vmatpush1.xpose.msra.mxu0 0.0
    %397 = vmatprep.subr.mxu0 0.0
    %398 = vmatpush1.xpose.msra.mxu0 0.0
    %399 = vmatprep.subr.mxu0 0.0
    %400 = vmatpush1.xpose.msra.mxu0 0.0
    %401 = vmatprep.subr.mxu0 0.0
    %402 = vmatpush1.xpose.msra.mxu0 0.0
    %403 = vmatprep.subr.mxu0 0.0
    %404 = vmatpush1.xpose.msra.mxu0 0.0
    %405 = vmatprep.subr.mxu0 0.0
    %406 = vmatpush1.xpose.msra.mxu0 0.0
    %407 = vmatprep.subr.mxu0 0.0
    %408 = vmatpush1.xpose.msra.mxu0 0.0
    %409 = vmatprep.subr.mxu0 0.0
    %410 = vmatpush1.xpose.msra.mxu0 0.0
    %411 = vmatprep.subr.mxu0 0.0
    %412 = vmatpush1.xpose.msra.mxu0 0.0
    %413 = vmatprep.subr.mxu0 0.0
    %414 = vmatpush1.xpose.msra.mxu0 0.0
    %415 = vmatprep.subr.mxu0 0.0
    %416 = vmatpush1.xpose.msra.mxu0 0.0
    %417 = vmatprep.subr.mxu0 0.0
    %418 = vmatpush1.xpose.msra.mxu0 0.0
    %419 = vmatprep.subr.mxu0 0.0
    %420 = vmatpush1.xpose.msra.mxu0 0.0
    %421 = vmatprep.subr.mxu0 0.0
    %422 = vmatpush1.xpose.msra.mxu0 0.0
    %423 = vmatprep.subr.mxu0 0.0
    %424 = vmatpush1.xpose.msra.mxu0 0.0
    %425 = vmatprep.subr.mxu0 0.0
    %426 = vmatpush1.xpose.msra.mxu0 0.0
    %427 = vmatprep.mubr.f32.mxu0 0.0
    %v428 = vand.u32 %v40, 4294901760
    %429 = vmatmul.mubr.f32.gmra.mrb[0].mxu0 %v428
    %v430 = vpop.f32.mrb[0].mxu0
    %v431 = vadd.f32 %v354, %v430
    %v432 = vpop.f32.mrb[0].mxu0
    %433 = vdwg.mxu0
    %434 = vmatprep.subr.mxu0 0.0
    %v435 = vand.u32 %v43, 4294901760
    %436 = vmatpush1.xpose.msra.mxu0 %v435
    %437 = vmatprep.subr.mxu0 0.0
    %v438 = vand.u32 %v46, 4294901760
    %439 = vmatpush1.xpose.msra.mxu0 %v438
    %440 = vmatprep.subr.mxu0 0.0
    %441 = vmatpush1.xpose.msra.mxu0 0.0
    %442 = vmatprep.subr.mxu0 0.0
    %443 = vmatpush1.xpose.msra.mxu0 0.0
    %444 = vmatprep.subr.mxu0 0.0
    %445 = vmatpush1.xpose.msra.mxu0 0.0
    %446 = vmatprep.subr.mxu0 0.0
    %447 = vmatpush1.xpose.msra.mxu0 0.0
    %448 = vmatprep.subr.mxu0 0.0
    %449 = vmatpush1.xpose.msra.mxu0 0.0
    %450 = vmatprep.subr.mxu0 0.0
    %451 = vmatpush1.xpose.msra.mxu0 0.0
    %452 = vmatprep.subr.mxu0 0.0
    %453 = vmatpush1.xpose.msra.mxu0 0.0
    %454 = vmatprep.subr.mxu0 0.0
    %455 = vmatpush1.xpose.msra.mxu0 0.0
    %456 = vmatprep.subr.mxu0 0.0
    %457 = vmatpush1.xpose.msra.mxu0 0.0
    %458 = vmatprep.subr.mxu0 0.0
    %459 = vmatpush1.xpose.msra.mxu0 0.0
    %460 = vmatprep.subr.mxu0 0.0
    %461 = vmatpush1.xpose.msra.mxu0 0.0
    %462 = vmatprep.subr.mxu0 0.0
    %463 = vmatpush1.xpose.msra.mxu0 0.0
    %464 = vmatprep.subr.mxu0 0.0
    %465 = vmatpush1.xpose.msra.mxu0 0.0
    %466 = vmatprep.subr.mxu0 0.0
    %467 = vmatpush1.xpose.msra.mxu0 0.0
    %468 = vmatprep.subr.mxu0 0.0
    %469 = vmatpush1.xpose.msra.mxu0 0.0
    %470 = vmatprep.subr.mxu0 0.0
    %471 = vmatpush1.xpose.msra.mxu0 0.0
    %472 = vmatprep.subr.mxu0 0.0
    %473 = vmatpush1.xpose.msra.mxu0 0.0
    %474 = vmatprep.subr.mxu0 0.0
    %475 = vmatpush1.xpose.msra.mxu0 0.0
    %476 = vmatprep.subr.mxu0 0.0
    %477 = vmatpush1.xpose.msra.mxu0 0.0
    %478 = vmatprep.subr.mxu0 0.0
    %479 = vmatpush1.xpose.msra.mxu0 0.0
    %480 = vmatprep.subr.mxu0 0.0
    %481 = vmatpush1.xpose.msra.mxu0 0.0
    %482 = vmatprep.subr.mxu0 0.0
    %483 = vmatpush1.xpose.msra.mxu0 0.0
    %484 = vmatprep.subr.mxu0 0.0
    %485 = vmatpush1.xpose.msra.mxu0 0.0
    %486 = vmatprep.subr.mxu0 0.0
    %487 = vmatpush1.xpose.msra.mxu0 0.0
    %488 = vmatprep.subr.mxu0 0.0
    %489 = vmatpush1.xpose.msra.mxu0 0.0
    %490 = vmatprep.subr.mxu0 0.0
    %491 = vmatpush1.xpose.msra.mxu0 0.0
    %492 = vmatprep.subr.mxu0 0.0
    %493 = vmatpush1.xpose.msra.mxu0 0.0
    %494 = vmatprep.subr.mxu0 0.0
    %495 = vmatpush1.xpose.msra.mxu0 0.0
    %496 = vmatprep.subr.mxu0 0.0
    %497 = vmatpush1.xpose.msra.mxu0 0.0
    %498 = vmatprep.subr.mxu0 0.0
    %499 = vmatpush1.xpose.msra.mxu0 0.0
    %500 = vmatprep.mubr.f32.mxu0 0.0
    %v501 = vand.u32 %v40, 4294901760
    %502 = vmatmul.mubr.f32.gmra.mrb[0].mxu0 %v501
    %v503 = vpop.f32.mrb[0].mxu0
    %v504 = vadd.f32 %v431, %v503
    %v505 = vpop.f32.mrb[0].mxu0
    %506 = vdwg.mxu0
    %vm507 = vcmask 130048
    %v508 = vsel %vm507, %v504, -inf
    %509 = vmax.xlane.f32.xlu0 %v508
    %v510 = vpop.xlane.xlu0 %509
    %v511 = vlaneseq
    %v512 = vshrl.u32 %v511, 7
    %s513 = smul.u32 0, 8
    %v514 = vstv %s513
    %v515 = vadd.s32 %v512, %v514
    %v516 = vlaneseq
    %v517 = vand.u32 %v516, 127
    %vm518 = vcmp.ne.s32.totalorder %v517, %v515
    %v519 = vsel %vm518, %v504, -1e+30
    %v520 = vsub.f32 %v519, %v510
    %v521 = vmul.f32 %v520, 1.442695
    %v522 = vpow.pop %v521
    %v523 = vsel %vm507, %v522, 0.0
    %524 = vadd.xlane.f32.xlu0 %v523
    %v525 = vpop.xlane.xlu0 %524
    %v527 = vlaneseq
    %v528 = vshrl.u32 %v527, 7
    %v529 = vsub.s32 %v517, %v528
    %v530 = vrot.slane %v525, %v529
    %vm532 = vcmask 57344
    %533 = vst.msk [vmem:[#allocation5] sm:$0x1] %vm532, %v530
    %v534 = vld [vmem:[%s1] sm:$0x1]
    %536 = vset.pattern.permute.xlu0 0
    %537 = vperm.xlu0 %536, %v33
    %v538 = vpop.permute.xlu0 %537
    %v541 = vlaneseq
    %v542 = vshrl.u32 %v541, 7
    %v543 = vsub.s32 0, %v542
    %v544 = vrot.slane %v534, %v543
    %vm546 = vcmp.eq.f32.partialorder %v538, %v544
    %v547 = vsel %vm546, %v522, 0.0
    %v548 = vsel %vm507, %v547, 0.0
    %549 = vadd.xlane.f32.xlu0 %v548
    %v550 = vpop.xlane.xlu0 %549
    %v552 = vlaneseq
    %v553 = vshrl.u32 %v552, 7
    %v554 = vsub.s32 %v517, %v553
    %v555 = vrot.slane %v550, %v554
    %557 = vst.msk [vmem:[#allocation6] sm:$0x1] %vm532, %v555
    // Predicated region
    $region22: #{tpu_custom_call.1} parent=1 // pred_check
      _
    $region23: #{tpu_custom_call.1} parent=1 // pred_check_branch
      %559 = sbr.rel (0) target = $region25
    $region24: #{tpu_custom_call.1} parent=1 // pred_region
      %s561 = ssub.s32 16, 16
      %562 = vsyncadd [#allocation4], %s561
      %s564 = sshll.u32 [#allocation5], 4
      %s565 = int_to_ptr.vmem [resolvable:$true] %s564
      %567 = dma.vmem_to_hbm [thread:$0]  %s565, 16, %s4, [#allocation4]
    $region25: #{tpu_custom_call.1} parent=1 // pred_fallthru
      _
    // Predicated region
    $region26: #{tpu_custom_call.1} parent=1 // pred_check
      _
    $region27: #{tpu_custom_call.1} parent=1 // pred_check_branch
      %569 = sbr.rel (0) target = $region29
    $region28: #{tpu_custom_call.1} parent=1 // pred_region
      %s571 = ssub.s32 16, 16
      %572 = vsyncadd [#allocation7], %s571
      %s574 = sshll.u32 [#allocation6], 4
      %s575 = int_to_ptr.vmem [resolvable:$true] %s574
      %577 = dma.vmem_to_hbm [thread:$0]  %s575, 16, %s5, [#allocation7]
    $region29: #{tpu_custom_call.1} parent=1 // pred_fallthru
      _
    // Predicated region
    $region30: #{tpu_custom_call.1} parent=1 // pred_check
      _
    $region31: #{tpu_custom_call.1} parent=1 // pred_check_branch
      %579 = sbr.rel (0) target = $region33
    $region32: #{tpu_custom_call.1} parent=1 // pred_region
      %580 = dma.done [#allocation4], 16
    $region33: #{tpu_custom_call.1} parent=1 // pred_fallthru
      _
    // Predicated region
    $region34: #{tpu_custom_call.1} parent=1 // pred_check
      _
    $region35: #{tpu_custom_call.1} parent=1 // pred_check_branch
      %582 = sbr.rel (0) target = $region37
    $region36: #{tpu_custom_call.1} parent=1 // pred_region
      %583 = dma.done [#allocation7], 16
    $region37: #{tpu_custom_call.1} parent=1 // pred_fallthru
      _
    %584 = vsyncpa [#allocation3], 1
    %585 = vsyncpa [#allocation4], 1
    %586 = vsyncpa [#allocation7], 1

</llo_original>
